<compile_context>
chip_gen: v7x
topology: tpu7x:2x2x1
jax: 0.10.0
libtpu: 0.0.40
codegen_flags: <defaults>
</compile_context>

<pallas_src>
import functools

import jax
import jax.numpy as jnp
from jax import lax
from jax.experimental import pallas as pl
from jax.experimental.pallas import tpu as pltpu


def _newsvendor_kernel(params_ref, x_ref, supp_ref,
                       z_ref, pinball_ref, error_ref, werror_ref,
                       *, num_iters):
    """params_ref: SMEM (2,) f32 = [critical_fractile, gamma]
       x_ref:      VMEM (TB, D) probability weights (native dtype)
       supp_ref:   VMEM (1, D)  support values
       outputs:    z (TB,1), pinball (TB,D), error (TB,D), w_error (TB,D)
    """
    cf = params_ref[0]
    gamma = params_ref[1]

    p = x_ref[...].astype(jnp.float32)        # (TB, D)
    y = supp_ref[...].astype(jnp.float32)     # (1, D)

    # Per-row statistics for the reduced 1-D objective (VPU mul + XLU reduce).
    py = p * y
    sp = jnp.sum(p, axis=-1, keepdims=True)          # (TB, 1)
    spy = jnp.sum(py, axis=-1, keepdims=True)
    a = jnp.sum(py * py, axis=-1, keepdims=True)     # sum (p*y)^2
    bq = jnp.sum(p * py, axis=-1, keepdims=True)     # sum p^2 * y
    c = jnp.sum(p * p, axis=-1, keepdims=True)       # sum p^2

    def objective(z):                                # z: (TB, 1)
        pin_term = cf * (spy - z * sp) + jnp.sum(
            p * jnp.maximum(z - y, 0.0), axis=-1, keepdims=True)
        quad = jnp.maximum(a - 2.0 * bq * z + c * z * z, 0.0)
        return pin_term + gamma * jnp.sqrt(quad)

    tb = p.shape[0]
    lo0 = jnp.zeros((tb, 1), jnp.float32)
    hi0 = jnp.ones((tb, 1), jnp.float32)

    def body(_, carry):
        lo, hi = carry
        third = (hi - lo) * (1.0 / 3.0)
        m1 = lo + third
        m2 = hi - third
        take_left = objective(m1) < objective(m2)
        return (jnp.where(take_left, lo, m1),
                jnp.where(take_left, m2, hi))

    lo, hi = lax.fori_loop(0, num_iters, body, (lo0, hi0))
    z = jnp.clip(0.5 * (lo + hi), 0.0, 1.0)

    error = y - z                                             # (TB, D)
    pinball = jnp.maximum(cf * error, (cf - 1.0) * error)
    w_error = p * error

    z_ref[...] = z.astype(z_ref.dtype)
    pinball_ref[...] = pinball.astype(pinball_ref.dtype)
    error_ref[...] = error.astype(error_ref.dtype)
    werror_ref[...] = w_error.astype(werror_ref.dtype)


def newsvendor_forward(x, support, gamma, critical_fractile, *,
                       apply_softmax=False, block_b=None, num_iters=64):
    """Forward pass of NewsvendorLayer.

    x: (B, D) batch of probability vectors (or a single (D,) vector).
    support: (D,) support values in [0, 1].
    Returns (z, pinball_loss, error, w_error), matching the cvxpy variables.
    """
    squeeze = x.ndim == 1
    if squeeze:
        x = x[None, :]
    if apply_softmax:
        x = jax.nn.softmax(x, axis=-1)

    b, d = x.shape
    assert support.shape == (d,), "support must have one value per probability bin"

    # Batch tile: multiple of 8 sublanes (unless it covers the whole small
    # batch); D is always full-extent so the lane dim stays untouched.
    if block_b is None:
        block_b = 256
    tb = min(block_b, b)
    if tb < b:
        tb = max(8, (tb // 8) * 8)
    n_blocks = pl.cdiv(b, tb)
    b_pad = n_blocks * tb
    if b_pad != b:
        # Pad with uniform distributions; padded rows are dropped below.
        pad = jnp.full((b_pad - b, d), 1.0 / d, dtype=x.dtype)
        x = jnp.concatenate([x, pad], axis=0)

    params = jnp.array([critical_fractile, gamma], dtype=jnp.float32)
    support_2d = support.reshape(1, d).astype(jnp.float32)

    kernel = functools.partial(_newsvendor_kernel, num_iters=num_iters)

    z, pinball, error, w_error = pl.pallas_call(
        kernel,
        out_shape=(
            jax.ShapeDtypeStruct((b_pad, 1), jnp.float32),
            jax.ShapeDtypeStruct((b_pad, d), jnp.float32),
            jax.ShapeDtypeStruct((b_pad, d), jnp.float32),
            jax.ShapeDtypeStruct((b_pad, d), jnp.float32),
        ),
        grid_spec=pltpu.PrefetchScalarGridSpec(
            num_scalar_prefetch=0,
            grid=(n_blocks,),
            in_specs=[
                pl.BlockSpec(memory_space=pltpu.MemorySpace.SMEM),  # cf, gamma
                pl.BlockSpec((tb, d), lambda i: (i, 0)),            # x tile
                pl.BlockSpec((1, d), lambda i: (0, 0)),             # support
            ],
            out_specs=[
                pl.BlockSpec((tb, 1), lambda i: (i, 0)),            # z
                pl.BlockSpec((tb, d), lambda i: (i, 0)),            # pinball
                pl.BlockSpec((tb, d), lambda i: (i, 0)),            # error
                pl.BlockSpec((tb, d), lambda i: (i, 0)),            # w_error
            ],
        ),
        compiler_params=pltpu.CompilerParams(
            dimension_semantics=("parallel",),
        ),
    )(params, x, support_2d)

    z, pinball, error, w_error = z[:b], pinball[:b], error[:b], w_error[:b]
    if squeeze:
        z, pinball, error, w_error = z[0], pinball[0], error[0], w_error[0]
    return z, pinball, error, w_error


def _reference_forward(x, support, gamma, critical_fractile, num_iters=64):
    """Pure-JAX reference of the same reduced problem / solver."""
    p = x.astype(jnp.float32)
    y = support.astype(jnp.float32)[None, :]
    cf = jnp.float32(critical_fractile)
    g = jnp.float32(gamma)

    py = p * y
    sp = jnp.sum(p, -1, keepdims=True)
    spy = jnp.sum(py, -1, keepdims=True)
    a = jnp.sum(py * py, -1, keepdims=True)
    bq = jnp.sum(p * py, -1, keepdims=True)
    c = jnp.sum(p * p, -1, keepdims=True)

    def objective(z):
        pin_term = cf * (spy - z * sp) + jnp.sum(
            p * jnp.maximum(z - y, 0.0), -1, keepdims=True)
        quad = jnp.maximum(a - 2.0 * bq * z + c * z * z, 0.0)
        return pin_term + g * jnp.sqrt(quad)

    lo = jnp.zeros((p.shape[0], 1), jnp.float32)
    hi = jnp.ones((p.shape[0], 1), jnp.float32)

    def body(_, carry):
        lo, hi = carry
        third = (hi - lo) / 3.0
        m1, m2 = lo + third, hi - third
        left = objective(m1) < objective(m2)
        return jnp.where(left, lo, m1), jnp.where(left, m2, hi)

    lo, hi = lax.fori_loop(0, num_iters, body, (lo, hi))
    z = jnp.clip(0.5 * (lo + hi), 0.0, 1.0)
    e = y - z
    pin = jnp.maximum(cf * e, (cf - 1.0) * e)
    return z, pin, e, p * e


if __name__ == "__main__":
    batch = 32
    num_support = 128          # D = len(support), number of probability bins
    gamma = 0.05
    critical_fractile = 0.8

    key = jax.random.PRNGKey(0)
    logits = jax.random.normal(key, (batch, num_support), dtype=jnp.float32)
    x = jax.nn.softmax(logits, axis=-1)                 # probability vectors
    support = jnp.linspace(0.0, 1.0, num_support, dtype=jnp.float32)

    outs = newsvendor_forward(x, support, gamma, critical_fractile, block_b=8)
    outs = jax.block_until_ready(outs)
    z, pinball, error, w_error = outs

    assert z.shape == (batch, 1)
    assert pinball.shape == error.shape == w_error.shape == (batch, num_support)

    # 1) Internal consistency of the returned cvxpy variables with z*.
    e_chk = support[None, :] - z
    assert jnp.allclose(error, e_chk, atol=1e-6)
    assert jnp.allclose(
        pinball,
        jnp.maximum(critical_fractile * e_chk, (critical_fractile - 1.0) * e_chk),
        atol=1e-6)
    assert jnp.allclose(w_error, x * e_chk, atol=1e-6)

    # 2) Cross-check against the pure-JAX implementation of the same solve.
    z_ref, pin_ref, err_ref, werr_ref = _reference_forward(
        x, support, gamma, critical_fractile)
    assert jnp.allclose(z, z_ref, atol=1e-3)
    assert jnp.allclose(error, err_ref, atol=1e-3)
    assert jnp.allclose(pinball, pin_ref, atol=1e-3)
    assert jnp.allclose(w_error, werr_ref, atol=1e-3)

    # 3) Optimality: kernel objective is no worse than a dense grid search.
    zs = jnp.linspace(0.0, 1.0, 2001)[None, :, None]          # (1, G, 1)
    e_g = support[None, None, :] - zs                         # (1, G, D)
    pin_g = jnp.maximum(critical_fractile * e_g,
                        (critical_fractile - 1.0) * e_g)
    obj_g = (jnp.sum(x[:, None, :] * pin_g, axis=-1)
             + gamma * jnp.sqrt(jnp.sum((x[:, None, :] * e_g) ** 2, axis=-1)))
    grid_best = obj_g.min(axis=-1)
    obj_kernel = (jnp.sum(x * pinball, axis=-1)
                  + gamma * jnp.sqrt(jnp.sum(w_error ** 2, axis=-1)))
    assert bool(jnp.all(obj_kernel <= grid_best + 1e-4))

    print("KERNEL_OK")
</pallas_src>

<mosaic_0001>
module attributes {stable_mosaic.version = 11 : i64} {
  func.func @_newsvendor_kernel(%arg0: i32, %arg1: memref<2xf32, #tpu.memory_space<smem>>, %arg2: memref<8x128xf32, #tpu.memory_space<vmem>>, %arg3: memref<1x128xf32, #tpu.memory_space<vmem>>, %arg4: memref<8x1xf32, #tpu.memory_space<vmem>>, %arg5: memref<8x128xf32, #tpu.memory_space<vmem>>, %arg6: memref<8x128xf32, #tpu.memory_space<vmem>>, %arg7: memref<8x128xf32, #tpu.memory_space<vmem>>) attributes {dimension_semantics = [#tpu.dimension_semantics<parallel>], iteration_bounds = array<i64: 4>, scalar_prefetch = 0 : i64, scratch_operands = 0 : i64, tpu.core_type = #tpu.core_type<tc>, window_params = [{transform_indices = @transform_0, window_bounds = array<i64: 2>}, {transform_indices = @transform_1, window_bounds = array<i64: 8, 128>}, {pipeline_mode = #tpu.pipeline_mode<synchronous>, transform_indices = @transform_2, window_bounds = array<i64: 1, 128>}, {transform_indices = @transform_3, window_bounds = array<i64: 8, 1>}, {transform_indices = @transform_4, window_bounds = array<i64: 8, 128>}, {transform_indices = @transform_5, window_bounds = array<i64: 8, 128>}, {transform_indices = @transform_6, window_bounds = array<i64: 8, 128>}]} {
    %c0 = arith.constant 0 : index
    %0 = memref.load %arg1[%c0] : memref<2xf32, #tpu.memory_space<smem>>
    %c1 = arith.constant 1 : index
    %1 = memref.load %arg1[%c1] : memref<2xf32, #tpu.memory_space<smem>>
    %c0_0 = arith.constant 0 : index
    %c0_1 = arith.constant 0 : index
    %2 = vector.load %arg2[%c0_0, %c0_1] : memref<8x128xf32, #tpu.memory_space<vmem>>, vector<8x128xf32>
    %c0_2 = arith.constant 0 : index
    %c0_3 = arith.constant 0 : index
    %3 = vector.load %arg3[%c0_2, %c0_3] : memref<1x128xf32, #tpu.memory_space<vmem>>, vector<1x128xf32>
    %4 = vector.broadcast %3 : vector<1x128xf32> to vector<8x128xf32>
    %5 = arith.mulf %2, %4 : vector<8x128xf32>
    %cst = arith.constant dense<0.000000e+00> : vector<8xf32>
    %6 = vector.multi_reduction <add>, %2, %cst [1] : vector<8x128xf32> to vector<8xf32>
    %7 = vector.shape_cast %6 : vector<8xf32> to vector<8x1xf32>
    %cst_4 = arith.constant dense<0.000000e+00> : vector<8xf32>
    %8 = vector.multi_reduction <add>, %5, %cst_4 [1] : vector<8x128xf32> to vector<8xf32>
    %9 = vector.shape_cast %8 : vector<8xf32> to vector<8x1xf32>
    %10 = arith.mulf %5, %5 : vector<8x128xf32>
    %cst_5 = arith.constant dense<0.000000e+00> : vector<8xf32>
    %11 = vector.multi_reduction <add>, %10, %cst_5 [1] : vector<8x128xf32> to vector<8xf32>
    %12 = vector.shape_cast %11 : vector<8xf32> to vector<8x1xf32>
    %13 = arith.mulf %2, %5 : vector<8x128xf32>
    %cst_6 = arith.constant dense<0.000000e+00> : vector<8xf32>
    %14 = vector.multi_reduction <add>, %13, %cst_6 [1] : vector<8x128xf32> to vector<8xf32>
    %15 = vector.shape_cast %14 : vector<8xf32> to vector<8x1xf32>
    %16 = arith.mulf %2, %2 : vector<8x128xf32>
    %cst_7 = arith.constant dense<0.000000e+00> : vector<8xf32>
    %17 = vector.multi_reduction <add>, %16, %cst_7 [1] : vector<8x128xf32> to vector<8xf32>
    %18 = vector.shape_cast %17 : vector<8xf32> to vector<8x1xf32>
    %cst_8 = arith.constant 0.000000e+00 : f32
    %19 = vector.broadcast %cst_8 : f32 to vector<8x1xf32>
    %cst_9 = arith.constant 1.000000e+00 : f32
    %20 = vector.broadcast %cst_9 : f32 to vector<8x1xf32>
    %c0_i32 = arith.constant 0 : i32
    %c64_i32 = arith.constant 64 : i32
    %21 = arith.addi %c0_i32, %c64_i32 : i32
    %c1_i32 = arith.constant 1 : i32
    %22:2 = scf.for %arg8 = %c0_i32 to %21 step %c1_i32 iter_args(%arg9 = %19, %arg10 = %20) -> (vector<8x1xf32>, vector<8x1xf32>)  : i32 {
      %44 = arith.subf %arg10, %arg9 : vector<8x1xf32>
      %cst_22 = arith.constant 0.333333343 : f32
      %45 = vector.broadcast %cst_22 : f32 to vector<8x1xf32>
      %46 = arith.mulf %44, %45 : vector<8x1xf32>
      %47 = arith.addf %arg9, %46 : vector<8x1xf32>
      %48 = arith.subf %arg10, %46 : vector<8x1xf32>
      %49 = arith.mulf %47, %7 : vector<8x1xf32>
      %50 = arith.subf %9, %49 : vector<8x1xf32>
      %51 = vector.broadcast %0 : f32 to vector<8x1xf32>
      %52 = arith.mulf %51, %50 : vector<8x1xf32>
      %53 = vector.broadcast %47 : vector<8x1xf32> to vector<8x128xf32>
      %54 = vector.broadcast %3 : vector<1x128xf32> to vector<8x128xf32>
      %55 = arith.subf %53, %54 : vector<8x128xf32>
      %cst_23 = arith.constant 0.000000e+00 : f32
      %56 = vector.broadcast %cst_23 : f32 to vector<8x128xf32>
      %57 = arith.maximumf %55, %56 : vector<8x128xf32>
      %58 = arith.mulf %2, %57 : vector<8x128xf32>
      %cst_24 = arith.constant dense<0.000000e+00> : vector<8xf32>
      %59 = vector.multi_reduction <add>, %58, %cst_24 [1] : vector<8x128xf32> to vector<8xf32>
      %60 = vector.shape_cast %59 : vector<8xf32> to vector<8x1xf32>
      %61 = arith.addf %52, %60 : vector<8x1xf32>
      %cst_25 = arith.constant 2.000000e+00 : f32
      %62 = vector.broadcast %cst_25 : f32 to vector<8x1xf32>
      %63 = arith.mulf %62, %15 : vector<8x1xf32>
      %64 = arith.mulf %63, %47 : vector<8x1xf32>
      %65 = arith.subf %12, %64 : vector<8x1xf32>
      %66 = arith.mulf %18, %47 : vector<8x1xf32>
      %67 = arith.mulf %66, %47 : vector<8x1xf32>
      %68 = arith.addf %65, %67 : vector<8x1xf32>
      %cst_26 = arith.constant 0.000000e+00 : f32
      %69 = vector.broadcast %cst_26 : f32 to vector<8x1xf32>
      %70 = arith.maximumf %68, %69 : vector<8x1xf32>
      %71 = math.sqrt %70 : vector<8x1xf32>
      %72 = vector.broadcast %1 : f32 to vector<8x1xf32>
      %73 = arith.mulf %72, %71 : vector<8x1xf32>
      %74 = arith.addf %61, %73 : vector<8x1xf32>
      %75 = arith.mulf %48, %7 : vector<8x1xf32>
      %76 = arith.subf %9, %75 : vector<8x1xf32>
      %77 = vector.broadcast %0 : f32 to vector<8x1xf32>
      %78 = arith.mulf %77, %76 : vector<8x1xf32>
      %79 = vector.broadcast %48 : vector<8x1xf32> to vector<8x128xf32>
      %80 = vector.broadcast %3 : vector<1x128xf32> to vector<8x128xf32>
      %81 = arith.subf %79, %80 : vector<8x128xf32>
      %cst_27 = arith.constant 0.000000e+00 : f32
      %82 = vector.broadcast %cst_27 : f32 to vector<8x128xf32>
      %83 = arith.maximumf %81, %82 : vector<8x128xf32>
      %84 = arith.mulf %2, %83 : vector<8x128xf32>
      %cst_28 = arith.constant dense<0.000000e+00> : vector<8xf32>
      %85 = vector.multi_reduction <add>, %84, %cst_28 [1] : vector<8x128xf32> to vector<8xf32>
      %86 = vector.shape_cast %85 : vector<8xf32> to vector<8x1xf32>
      %87 = arith.addf %78, %86 : vector<8x1xf32>
      %cst_29 = arith.constant 2.000000e+00 : f32
      %88 = vector.broadcast %cst_29 : f32 to vector<8x1xf32>
      %89 = arith.mulf %88, %15 : vector<8x1xf32>
      %90 = arith.mulf %89, %48 : vector<8x1xf32>
      %91 = arith.subf %12, %90 : vector<8x1xf32>
      %92 = arith.mulf %18, %48 : vector<8x1xf32>
      %93 = arith.mulf %92, %48 : vector<8x1xf32>
      %94 = arith.addf %91, %93 : vector<8x1xf32>
      %cst_30 = arith.constant 0.000000e+00 : f32
      %95 = vector.broadcast %cst_30 : f32 to vector<8x1xf32>
      %96 = arith.maximumf %94, %95 : vector<8x1xf32>
      %97 = math.sqrt %96 : vector<8x1xf32>
      %98 = vector.broadcast %1 : f32 to vector<8x1xf32>
      %99 = arith.mulf %98, %97 : vector<8x1xf32>
      %100 = arith.addf %87, %99 : vector<8x1xf32>
      %101 = arith.cmpf olt, %74, %100 : vector<8x1xf32>
      %102 = arith.select %101, %arg9, %47 : vector<8x1xi1>, vector<8x1xf32>
      %103 = arith.select %101, %48, %arg10 : vector<8x1xi1>, vector<8x1xf32>
      scf.yield %102, %103 : vector<8x1xf32>, vector<8x1xf32>
    }
    %23 = arith.addf %22#0, %22#1 : vector<8x1xf32>
    %cst_10 = arith.constant 5.000000e-01 : f32
    %24 = vector.broadcast %cst_10 : f32 to vector<8x1xf32>
    %25 = arith.mulf %24, %23 : vector<8x1xf32>
    %cst_11 = arith.constant 0.000000e+00 : f32
    %cst_12 = arith.constant 1.000000e+00 : f32
    %26 = vector.broadcast %cst_11 : f32 to vector<8x1xf32>
    %27 = arith.maximumf %26, %25 : vector<8x1xf32>
    %28 = vector.broadcast %cst_12 : f32 to vector<8x1xf32>
    %29 = arith.minimumf %28, %27 : vector<8x1xf32>
    %30 = vector.broadcast %3 : vector<1x128xf32> to vector<8x128xf32>
    %31 = vector.broadcast %29 : vector<8x1xf32> to vector<8x128xf32>
    %32 = arith.subf %30, %31 : vector<8x128xf32>
    %33 = vector.broadcast %0 : f32 to vector<8x128xf32>
    %34 = arith.mulf %33, %32 : vector<8x128xf32>
    %cst_13 = arith.constant 1.000000e+00 : f32
    %35 = arith.subf %0, %cst_13 : f32
    %36 = vector.broadcast %35 : f32 to vector<8x128xf32>
    %37 = arith.mulf %36, %32 : vector<8x128xf32>
    %38 = arith.maximumf %34, %37 : vector<8x128xf32>
    %39 = arith.mulf %2, %32 : vector<8x128xf32>
    %c0_14 = arith.constant 0 : index
    %c0_15 = arith.constant 0 : index
    %40 = vector.load %arg4[%c0_14, %c0_15] : memref<8x1xf32, #tpu.memory_space<vmem>>, vector<8x1xf32>
    tpu.vector_store %arg4[%c0_14, %c0_15], %29 {strides = array<i32>} : memref<8x1xf32, #tpu.memory_space<vmem>>, vector<8x1xf32>,
    %c0_16 = arith.constant 0 : index
    %c0_17 = arith.constant 0 : index
    %41 = vector.load %arg5[%c0_16, %c0_17] : memref<8x128xf32, #tpu.memory_space<vmem>>, vector<8x128xf32>
    tpu.vector_store %arg5[%c0_16, %c0_17], %38 {strides = array<i32>} : memref<8x128xf32, #tpu.memory_space<vmem>>, vector<8x128xf32>,
    %c0_18 = arith.constant 0 : index
    %c0_19 = arith.constant 0 : index
    %42 = vector.load %arg6[%c0_18, %c0_19] : memref<8x128xf32, #tpu.memory_space<vmem>>, vector<8x128xf32>
    tpu.vector_store %arg6[%c0_18, %c0_19], %32 {strides = array<i32>} : memref<8x128xf32, #tpu.memory_space<vmem>>, vector<8x128xf32>,
    %c0_20 = arith.constant 0 : index
    %c0_21 = arith.constant 0 : index
    %43 = vector.load %arg7[%c0_20, %c0_21] : memref<8x128xf32, #tpu.memory_space<vmem>>, vector<8x128xf32>
    tpu.vector_store %arg7[%c0_20, %c0_21], %39 {strides = array<i32>} : memref<8x128xf32, #tpu.memory_space<vmem>>, vector<8x128xf32>,
    return
  }
  func.func @transform_0(%arg0: i32) -> i32 {
    %c0_i32 = arith.constant 0 : i32
    %c0_i32_0 = arith.constant 0 : i32
    return %c0_i32 : i32
  }
  func.func @transform_1(%arg0: i32) -> (i32, i32) {
    %c0_i32 = arith.constant 0 : i32
    %c0_i32_0 = arith.constant 0 : i32
    return %arg0, %c0_i32 : i32, i32
  }
  func.func @transform_2(%arg0: i32) -> (i32, i32) {
    %c0_i32 = arith.constant 0 : i32
    %c0_i32_0 = arith.constant 0 : i32
    %c0_i32_1 = arith.constant 0 : i32
    return %c0_i32, %c0_i32_0 : i32, i32
  }
  func.func @transform_3(%arg0: i32) -> (i32, i32) {
    %c0_i32 = arith.constant 0 : i32
    %c0_i32_0 = arith.constant 0 : i32
    return %arg0, %c0_i32 : i32, i32
  }
  func.func @transform_4(%arg0: i32) -> (i32, i32) {
    %c0_i32 = arith.constant 0 : i32
    %c0_i32_0 = arith.constant 0 : i32
    return %arg0, %c0_i32 : i32, i32
  }
  func.func @transform_5(%arg0: i32) -> (i32, i32) {
    %c0_i32 = arith.constant 0 : i32
    %c0_i32_0 = arith.constant 0 : i32
    return %arg0, %c0_i32 : i32, i32
  }
  func.func @transform_6(%arg0: i32) -> (i32, i32) {
    %c0_i32 = arith.constant 0 : i32
    %c0_i32_0 = arith.constant 0 : i32
    return %arg0, %c0_i32 : i32, i32
  }
}

</mosaic_0001>

<llo_original>
// kernel: tpu_custom_call.1
$region0: #{tpu_custom_call.1}
  #allocation0 [shape = 'u32[]', space=smem, size = 0x4, offset = 0x4, fixed_abs, tag = 'smem constant byte address 0x4 - core index']
  #allocation1 [shape = 'u32[144,128]{1,0:T(1,128)}', space=vmem, size = 0x12000, scoped, tag = 'internal scratch']
  %s0 = inlined_call_operand.hbm [shape: f32[2], index: 0, kind: input, shape index: {}]
  %s1 = inlined_call_operand.hbm [shape: f32[32,128], index: 1, kind: input, shape index: {}]
  %s2 = inlined_call_operand.vmem [shape: f32[1,128], index: 2, kind: input, shape index: {}]
  %s3 = inlined_call_operand.vmem [shape: f32[32,1], index: 3, kind: output, shape index: {0}]
  %s4 = inlined_call_operand.hbm [shape: f32[32,128], index: 4, kind: output, shape index: {1}]
  %s5 = inlined_call_operand.hbm [shape: f32[32,128], index: 5, kind: output, shape index: {2}]
  %s6 = inlined_call_operand.hbm [shape: f32[32,128], index: 6, kind: output, shape index: {3}]
  %7 = xla_tuple %s3, %s4, %s5, %s6
  %s8 = sld [smem:[#allocation0]]
  $region84: #{tpu_custom_call.1} parent=0
    _
  %s10 = ssub.s32 1, %s8
  %s11 = scalar_select 0, %s10, %s8
  $region1: #{tpu_custom_call.1} parent=0
    #allocation2 [shape = 'u8[512]{0}', space=smem, size = 0x200, scoped, tag = 'input window, operand 0, single buffered']
    #allocation3 [shape = 's32[2]{0}', space=sflag, size = 0x8, scoped, tag = 'scoped memory for tpu_custom_call.1']
    #allocation4 [shape = 's32[2]{0}', space=sflag, size = 0x8, scoped, tag = 'scoped memory for tpu_custom_call.1']
    #allocation5 [shape = 's32[2]{0}', space=sflag, size = 0x8, scoped, tag = 'scoped memory for tpu_custom_call.1']
    #allocation6 [shape = 'u8[8192]{0}', space=vmem, size = 0x2000, scoped, tag = 'input window, operand 1']
    #allocation7 [shape = 'u8[8192]{0}', space=vmem, size = 0x2000, scoped, tag = 'output window, operand 1']
    #allocation8 [shape = 'u8[8192]{0}', space=vmem, size = 0x2000, scoped, tag = 'output window, operand 2']
    #allocation9 [shape = 's32[2]{0}', space=sflag, size = 0x8, scoped, tag = 'scoped memory for tpu_custom_call.1']
    #allocation10 [shape = 'u8[8192]{0}', space=vmem, size = 0x2000, scoped, tag = 'output window, operand 3']
    %12 = vsyncpa [#allocation5], 0
    %13 = vsyncpa [#allocation3], 0
    %s14 = scalar_lea.sflag [#allocation3], 1
    %15 = vsyncpa %s14, 0
    %16 = vsyncpa [#allocation4], 0
    %s17 = scalar_lea.sflag [#allocation4], 1
    %18 = vsyncpa %s17, 0
    %19 = vsyncpa [#allocation9], 0
    %s20 = scalar_lea.sflag [#allocation9], 1
    %21 = vsyncpa %s20, 0
    loop: start=0, step=1, limit=6
    $region2: #{tpu_custom_call.1} parent=1 // loop_pre_header
      _
    $region3: #{tpu_custom_call.1} parent=1 // loop_header
      %s23 = sphi 0, %s27
      %p24 = scmp.ge.s32.totalorder %s23, 6
      %s31 = sphi 0, %s31
      %s33 = sphi 0, %s31
      %s34 = sphi 0, %s33
      %s48 = sphi 0, %s34
      %s54 = sphi 0, %s56
      %s57 = sphi 0, %s54
      %s58 = sphi 0, %s57
      %s74 = sphi 0, %s58
      %s78 = sphi 0, %s78
      %s80 = sphi 0, %s78
      %s81 = sphi 0, %s80
      %s95 = sphi 0, %s81
      %s101 = sphi 0, %s103
      %s104 = sphi 0, %s101
      %s105 = sphi 0, %s104
      %s121 = sphi 0, %s105
      %s127 = sphi 0, %s129
      %s130 = sphi 0, %s127
      %s131 = sphi 0, %s130
      %s147 = sphi 0, %s131
      %s153 = sphi 0, %s155
      %s156 = sphi 0, %s153
      %s157 = sphi 0, %s156
      %s173 = sphi 0, %s157
      %s179 = sphi 0, %s181
      %s182 = sphi 0, %s179
      %s183 = sphi 0, %s182
      %s199 = sphi 0, %s183
    $region4: #{tpu_custom_call.1} parent=1 // loop_header_branch
      %26 = sbr.rel (%p24) target = $region8
    $region5: #{tpu_custom_call.1} parent=1 // loop_body
      %s28 = ssub.s32 %s23, 1
      %s29 = ssub.s32 %s23, 2
      %s30 = sadd.s32 %s23, 1
      %s32 = sadd.s32 %s31, 1
      %p35 = scmp.eq.s32.totalorder %s23, 3
      %p36 = scmp.ne.s32.totalorder %s31, %s33
      %p37 = scmp.eq.s32.totalorder %s23, 0
      %p38 = por %p36, %p37
      %p39 = scmp.ne.s32.totalorder %s31, %s33
      %p40 = scmp.eq.s32.totalorder %s28, 3
      %p41 = por %p39, %p40
      %p42 = scmp.ne.s32.totalorder %s33, %s34
      %p43 = scmp.eq.s32.totalorder %s28, 0
      %p44 = por %p42, %p43
      %p45 = scmp.ne.s32.totalorder %s33, %s34
      %p46 = scmp.eq.s32.totalorder %s29, 3
      %p47 = por %p45, %p46
      %p49 = scmp.ne.s32.totalorder %s34, %s48
      %p50 = scmp.eq.s32.totalorder %s29, 0
      %p51 = por %p49, %p50
      %s52 = ssub.s32 %s23, %s30
      %p53 = scmp.eq.s32.totalorder %s52, 0
      %s55 = sadd.s32 %s54, 1
      %s56 = scalar_select %p53, %s54, %s55
      %p59 = pneg %p53
      %p60 = scmp.eq.s32.totalorder %s23, 3
      %p61 = por %p59, %p60
      %p62 = scmp.ne.s32.totalorder %s54, %s57
      %p63 = scmp.eq.s32.totalorder %s23, 0
      %p64 = por %p62, %p63
      %p65 = scmp.ne.s32.totalorder %s54, %s57
      %p66 = scmp.eq.s32.totalorder %s28, 3
      %p67 = por %p65, %p66
      %p68 = scmp.ne.s32.totalorder %s57, %s58
      %p69 = scmp.eq.s32.totalorder %s28, 0
      %p70 = por %p68, %p69
      %p71 = scmp.ne.s32.totalorder %s57, %s58
      %p72 = scmp.eq.s32.totalorder %s29, 3
      %p73 = por %p71, %p72
      %p75 = scmp.ne.s32.totalorder %s58, %s74
      %p76 = scmp.eq.s32.totalorder %s29, 0
      %p77 = por %p75, %p76
      %s79 = sadd.s32 %s78, 1
      %p82 = scmp.eq.s32.totalorder %s23, 3
      %p83 = scmp.ne.s32.totalorder %s78, %s80
      %p84 = scmp.eq.s32.totalorder %s23, 0
      %p85 = por %p83, %p84
      %p86 = scmp.ne.s32.totalorder %s78, %s80
      %p87 = scmp.eq.s32.totalorder %s28, 3
      %p88 = por %p86, %p87
      %p89 = scmp.ne.s32.totalorder %s80, %s81
      %p90 = scmp.eq.s32.totalorder %s28, 0
      %p91 = por %p89, %p90
      %p92 = scmp.ne.s32.totalorder %s80, %s81
      %p93 = scmp.eq.s32.totalorder %s29, 3
      %p94 = por %p92, %p93
      %p96 = scmp.ne.s32.totalorder %s81, %s95
      %p97 = scmp.eq.s32.totalorder %s29, 0
      %p98 = por %p96, %p97
      %s99 = ssub.s32 %s23, %s30
      %p100 = scmp.eq.s32.totalorder %s99, 0
      %s102 = sadd.s32 %s101, 1
      %s103 = scalar_select %p100, %s101, %s102
      %p106 = pneg %p100
      %p107 = scmp.eq.s32.totalorder %s23, 3
      %p108 = por %p106, %p107
      %p109 = scmp.ne.s32.totalorder %s101, %s104
      %p110 = scmp.eq.s32.totalorder %s23, 0
      %p111 = por %p109, %p110
      %p112 = scmp.ne.s32.totalorder %s101, %s104
      %p113 = scmp.eq.s32.totalorder %s28, 3
      %p114 = por %p112, %p113
      %p115 = scmp.ne.s32.totalorder %s104, %s105
      %p116 = scmp.eq.s32.totalorder %s28, 0
      %p117 = por %p115, %p116
      %p118 = scmp.ne.s32.totalorder %s104, %s105
      %p119 = scmp.eq.s32.totalorder %s29, 3
      %p120 = por %p118, %p119
      %p122 = scmp.ne.s32.totalorder %s105, %s121
      %p123 = scmp.eq.s32.totalorder %s29, 0
      %p124 = por %p122, %p123
      %s125 = ssub.s32 %s23, %s30
      %p126 = scmp.eq.s32.totalorder %s125, 0
      %s128 = sadd.s32 %s127, 1
      %s129 = scalar_select %p126, %s127, %s128
      %p132 = pneg %p126
      %p133 = scmp.eq.s32.totalorder %s23, 3
      %p134 = por %p132, %p133
      %p135 = scmp.ne.s32.totalorder %s127, %s130
      %p136 = scmp.eq.s32.totalorder %s23, 0
      %p137 = por %p135, %p136
      %p138 = scmp.ne.s32.totalorder %s127, %s130
      %p139 = scmp.eq.s32.totalorder %s28, 3
      %p140 = por %p138, %p139
      %p141 = scmp.ne.s32.totalorder %s130, %s131
      %p142 = scmp.eq.s32.totalorder %s28, 0
      %p143 = por %p141, %p142
      %p144 = scmp.ne.s32.totalorder %s130, %s131
      %p145 = scmp.eq.s32.totalorder %s29, 3
      %p146 = por %p144, %p145
      %p148 = scmp.ne.s32.totalorder %s131, %s147
      %p149 = scmp.eq.s32.totalorder %s29, 0
      %p150 = por %p148, %p149
      %s151 = ssub.s32 %s23, %s30
      %p152 = scmp.eq.s32.totalorder %s151, 0
      %s154 = sadd.s32 %s153, 1
      %s155 = scalar_select %p152, %s153, %s154
      %p158 = pneg %p152
      %p159 = scmp.eq.s32.totalorder %s23, 3
      %p160 = por %p158, %p159
      %p161 = scmp.ne.s32.totalorder %s153, %s156
      %p162 = scmp.eq.s32.totalorder %s23, 0
      %p163 = por %p161, %p162
      %p164 = scmp.ne.s32.totalorder %s153, %s156
      %p165 = scmp.eq.s32.totalorder %s28, 3
      %p166 = por %p164, %p165
      %p167 = scmp.ne.s32.totalorder %s156, %s157
      %p168 = scmp.eq.s32.totalorder %s28, 0
      %p169 = por %p167, %p168
      %p170 = scmp.ne.s32.totalorder %s156, %s157
      %p171 = scmp.eq.s32.totalorder %s29, 3
      %p172 = por %p170, %p171
      %p174 = scmp.ne.s32.totalorder %s157, %s173
      %p175 = scmp.eq.s32.totalorder %s29, 0
      %p176 = por %p174, %p175
      %s177 = ssub.s32 %s23, %s30
      %p178 = scmp.eq.s32.totalorder %s177, 0
      %s180 = sadd.s32 %s179, 1
      %s181 = scalar_select %p178, %s179, %s180
      %p184 = pneg %p178
      %p185 = scmp.eq.s32.totalorder %s23, 3
      %p186 = por %p184, %p185
      %p187 = scmp.ne.s32.totalorder %s179, %s182
      %p188 = scmp.eq.s32.totalorder %s23, 0
      %p189 = por %p187, %p188
      %p190 = scmp.ne.s32.totalorder %s179, %s182
      %p191 = scmp.eq.s32.totalorder %s28, 3
      %p192 = por %p190, %p191
      %p193 = scmp.ne.s32.totalorder %s182, %s183
      %p194 = scmp.eq.s32.totalorder %s28, 0
      %p195 = por %p193, %p194
      %p196 = scmp.ne.s32.totalorder %s182, %s183
      %p197 = scmp.eq.s32.totalorder %s29, 3
      %p198 = por %p196, %p197
      %p200 = scmp.ne.s32.totalorder %s183, %s199
      %p201 = scmp.eq.s32.totalorder %s29, 0
      %p202 = por %p200, %p201
      %p203 = scmp.le.s32.totalorder 1, %s23
      %p204 = scmp.lt.s32.totalorder %s23, 5
      %p205 = pnand %p203, %p204
      %p206 = pneg %p205
      // Predicated region
      $region9: #{tpu_custom_call.1} parent=5 // pred_check
        _
      $region10: #{tpu_custom_call.1} parent=5 // pred_check_branch
        %208 = sbr.rel (%p205) target = $region12
      $region11: #{tpu_custom_call.1} parent=5 // pred_region
        %s209 = ssub.s32 %s23, 1
        // Predicated region
        $region13: #{tpu_custom_call.1} parent=11 // pred_check
          %p210 = pneg %p44
        $region14: #{tpu_custom_call.1} parent=11 // pred_check_branch
          %212 = sbr.rel (%p210) target = $region16
        $region15: #{tpu_custom_call.1} parent=11 // pred_region
          %s214 = ssub.s32 16, 16
          %215 = vsyncadd [#allocation5], %s214
          %218 = dma.hbm_to_smem %s0, 16, [#allocation2], [#allocation5]
        $region16: #{tpu_custom_call.1} parent=11 // pred_fallthru
          _
        // Predicated region
        $region17: #{tpu_custom_call.1} parent=11 // pred_check
          %p219 = pneg %p91
        $region18: #{tpu_custom_call.1} parent=11 // pred_check_branch
          %221 = sbr.rel (%p219) target = $region20
        $region19: #{tpu_custom_call.1} parent=11 // pred_region
          _
        $region20: #{tpu_custom_call.1} parent=11 // pred_fallthru
          _
      $region12: #{tpu_custom_call.1} parent=5 // pred_fallthru
        _
      %p222 = scmp.lt.s32.totalorder %s23, 4
      // Predicated region
      $region21: #{tpu_custom_call.1} parent=5 // pred_check
        %p223 = pneg %p222
      $region22: #{tpu_custom_call.1} parent=5 // pred_check_branch
        %225 = sbr.rel (%p223) target = $region24
      $region23: #{tpu_custom_call.1} parent=5 // pred_region
        // Predicated region
        $region25: #{tpu_custom_call.1} parent=23 // pred_check
          %p226 = pneg %p64
        $region26: #{tpu_custom_call.1} parent=23 // pred_check_branch
          %228 = sbr.rel (%p226) target = $region28
        $region27: #{tpu_custom_call.1} parent=23 // pred_region
          %s229 = sand.u32 %s54, 1
          %s230 = scalar_lea.sflag [#allocation3], %s229
          %s231 = sand.u32 %s54, 1
          %s232 = smul.addr %s231, 8
          %s233 = scalar_lea.vmem [#allocation6], %s232
          %s235 = ssub.s32 128, 128
          %236 = vsyncadd %s230, %s235
          %s237 = smul.addr %s23, 128
          %s238 = scalar_lea.hbm %s1, %s237
          %s240 = sshll.u32 %s233, 4
          %s241 = int_to_ptr.vmem [resolvable:$true] %s240
          %243 = dma.hbm_to_vmem [thread:$0]  %s238, 128, %s241, %s230
        $region28: #{tpu_custom_call.1} parent=23 // pred_fallthru
          _
      $region24: #{tpu_custom_call.1} parent=5 // pred_fallthru
        _
      %p244 = scmp.le.s32.totalorder 1, %s23
      %p245 = scmp.lt.s32.totalorder %s23, 5
      %p246 = pnand %p244, %p245
      %p247 = pneg %p246
      // Predicated region
      $region29: #{tpu_custom_call.1} parent=5 // pred_check
        _
      $region30: #{tpu_custom_call.1} parent=5 // pred_check_branch
        %249 = sbr.rel (%p246) target = $region32
      $region31: #{tpu_custom_call.1} parent=5 // pred_region
        %s250 = ssub.s32 %s23, 1
        // Predicated region
        $region33: #{tpu_custom_call.1} parent=31 // pred_check
          %p251 = pneg %p44
        $region34: #{tpu_custom_call.1} parent=31 // pred_check_branch
          %253 = sbr.rel (%p251) target = $region36
        $region35: #{tpu_custom_call.1} parent=31 // pred_region
          %254 = dma.done [#allocation5], 16
        $region36: #{tpu_custom_call.1} parent=31 // pred_fallthru
          _
        %s255 = sand.u32 %s57, 1
        %s256 = scalar_lea.sflag [#allocation3], %s255
        %s257 = sand.u32 %s57, 1
        %s258 = smul.addr %s257, 8
        %s259 = scalar_lea.vmem [#allocation6], %s258
        // Predicated region
        $region37: #{tpu_custom_call.1} parent=31 // pred_check
          %p260 = pneg %p70
        $region38: #{tpu_custom_call.1} parent=31 // pred_check_branch
          %262 = sbr.rel (%p260) target = $region40
        $region39: #{tpu_custom_call.1} parent=31 // pred_region
          %263 = dma.done %s256, 128
        $region40: #{tpu_custom_call.1} parent=31 // pred_fallthru
          _
        %264 = sfence
        %p265 = pneg %p44
        %p266 = pneg %p41
        %s267 = sand.u32 %s57, 1
        %s268 = scalar_lea.sflag [#allocation3], %s267
        %s269 = sand.u32 %s57, 1
        %s270 = smul.addr %s269, 8
        %s271 = scalar_lea.vmem [#allocation6], %s270
        %p272 = pneg %p70
        %p273 = pneg %p67
        %p274 = pneg %p91
        %p275 = pneg %p88
        %p276 = pneg %p117
        %p277 = pneg %p114
        %p278 = scmp.lt.s32.totalorder %s28, 3
        %s279 = scalar_select %p278, %s28, 3
        %s280 = smul.addr %s279, 8
        %s281 = scalar_lea.vmem %s3, %s280
        %p282 = pneg %p143
        %p283 = pneg %p140
        %s284 = sand.u32 %s130, 1
        %s285 = scalar_lea.sflag [#allocation4], %s284
        %s286 = sand.u32 %s130, 1
        %s287 = smul.addr %s286, 8
        %s288 = scalar_lea.vmem [#allocation7], %s287
        %p289 = pneg %p169
        %p290 = pneg %p166
        %s291 = sand.u32 %s28, 1
        %s292 = scalar_lea.sflag [#allocation9], %s291
        %s293 = sand.u32 %s156, 1
        %s294 = smul.addr %s293, 8
        %s295 = scalar_lea.vmem [#allocation8], %s294
        %p296 = pneg %p195
        %p297 = pneg %p192
        %s298 = sand.u32 %s28, 1
        %s299 = scalar_lea.sflag [#allocation9], %s298
        %s300 = sand.u32 %s182, 1
        %s301 = smul.addr %s300, 8
        %s302 = scalar_lea.vmem [#allocation10], %s301
        %p303 = scmp.lt.s32.totalorder %s28, 3
        %s304 = scalar_select %p303, %s28, 3
        %s305 = smul.addr %s304, 8
        %s306 = scalar_lea.vmem %s3, %s305
        %s307 = sld [smem:[#allocation2]]
        %s308 = sld [smem:[#allocation2 + $0x1]]
        %v309 = vld [vmem:[%s259] sm:$0xff]
        %v310 = vld [vmem:[%s2] sm:$0x1]
        %v312 = vlaneseq
        %v313 = vshrl.u32 %v312, 7
        %v314 = vsub.s32 0, %v313
        %v315 = vrot.slane %v310, %v314
        %v317 = vmul.f32 %v309, %v315
        %318 = vadd.xlane.f32.xlu0 %v309
        %v319 = vpop.xlane.xlu0 %318
        %320 = vadd.xlane.f32.xlu0 %v317
        %v321 = vpop.xlane.xlu0 %320
        %v322 = vmul.f32 %v317, %v317
        %323 = vadd.xlane.f32.xlu0 %v322
        %v324 = vpop.xlane.xlu0 %323
        %v325 = vmul.f32 %v309, %v317
        %326 = vadd.xlane.f32.xlu0 %v325
        %v327 = vpop.xlane.xlu0 %326
        %v328 = vmul.f32 %v309, %v309
        %329 = vadd.xlane.f32.xlu0 %v328
        %v330 = vpop.xlane.xlu0 %329
        loop: start=0, step=1, limit=64
        $region41: #{tpu_custom_call.1} parent=31 // loop_pre_header
          _
        $region42: #{tpu_custom_call.1} parent=31 // loop_header
          %s332 = sphi 0, %s336
          %p333 = scmp.ge.s32.totalorder %s332, 64
          %v337 = vphi 0.0, %v395
          %v338 = vphi 1.0, %v396
        $region43: #{tpu_custom_call.1} parent=31 // loop_header_branch
          %335 = sbr.rel (%p333) target = $region47
        $region44: #{tpu_custom_call.1} parent=31 // loop_body
          %v339 = vsub.f32 %v338, %v337
          %v340 = vmul.f32 %v339, 0.33333334
          %v341 = vadd.f32 %v337, %v340
          %v342 = vsub.f32 %v338, %v340
          %v343 = vmul.f32 %v341, %v319
          %v344 = vsub.f32 %v321, %v343
          %v345 = vstv %s307
          %v346 = vmul.f32 %v345, %v344
          %v347 = vsub.f32 %v341, %v315
          %v348 = vmax.f32 %v347, 0.0
          %v349 = vmul.f32 %v309, %v348
          %350 = vadd.xlane.f32.xlu0 %v349
          %v351 = vpop.xlane.xlu0 %350
          %v352 = vadd.f32 %v346, %v351
          %v353 = vmul.f32 %v327, 2.0
          %v354 = vmul.f32 %v353, %v341
          %v355 = vsub.f32 %v324, %v354
          %v356 = vmul.f32 %v330, %v341
          %v357 = vmul.f32 %v356, %v341
          %v358 = vadd.f32 %v355, %v357
          %v359 = vmax.f32 %v358, 0.0
          %v360 = vrsqrt.pop %v359
          %v361 = vmul.f32 %v359, %v360
          %vm362 = vcmp.eq.f32.partialorder %v359, inf
          %v363 = vsel %vm362, %v359, %v361
          %vm364 = vcmp.eq.f32.partialorder %v359, 0.0
          %v365 = vand.u32 %v359, 2147483648
          %v366 = vsel %vm364, %v365, %v363
          %v367 = vstv %s308
          %v368 = vmul.f32 %v367, %v366
          %v369 = vadd.f32 %v352, %v368
          %v370 = vmul.f32 %v342, %v319
          %v371 = vsub.f32 %v321, %v370
          %v372 = vmul.f32 %v345, %v371
          %v373 = vsub.f32 %v342, %v315
          %v374 = vmax.f32 %v373, 0.0
          %v375 = vmul.f32 %v309, %v374
          %376 = vadd.xlane.f32.xlu0 %v375
          %v377 = vpop.xlane.xlu0 %376
          %v378 = vadd.f32 %v372, %v377
          %v379 = vmul.f32 %v353, %v342
          %v380 = vsub.f32 %v324, %v379
          %v381 = vmul.f32 %v330, %v342
          %v382 = vmul.f32 %v381, %v342
          %v383 = vadd.f32 %v380, %v382
          %v384 = vmax.f32 %v383, 0.0
          %v385 = vrsqrt.pop %v384
          %v386 = vmul.f32 %v384, %v385
          %vm387 = vcmp.eq.f32.partialorder %v384, inf
          %v388 = vsel %vm387, %v384, %v386
          %vm389 = vcmp.eq.f32.partialorder %v384, 0.0
          %v390 = vand.u32 %v384, 2147483648
          %v391 = vsel %vm389, %v390, %v388
          %v392 = vmul.f32 %v367, %v391
          %v393 = vadd.f32 %v378, %v392
          %vm394 = vcmp.lt.f32.partialorder %v369, %v393
          %v395 = vsel %vm394, %v337, %v341
          %v396 = vsel %vm394, %v342, %v338
        $region45: #{tpu_custom_call.1} parent=31 // loop_footer
          %s336 = sadd.s32 1, %s332
        $region46: #{tpu_custom_call.1} parent=31 // loop_footer_branch
          %331 = sbr.rel target = $region42
        $region47: #{tpu_custom_call.1} parent=31 // loop_exit
          _
        %v397 = vadd.f32 %v337, %v338
        %v398 = vmul.f32 %v397, 0.5
        %v399 = vmax.f32 %v398, 0.0
        %v400 = vmin.f32 %v399, 1.0
        %v401 = vsub.f32 %v315, %v400
        %v402 = vstv %s307
        %v403 = vmul.f32 %v402, %v401
        %s404 = ssub.f32 %s307, 1.0
        %v405 = vstv %s404
        %v406 = vmul.f32 %v405, %v401
        %v407 = vmax.f32 %v403, %v406
        %v408 = vmul.f32 %v309, %v401
        %vm409 = vcmask 7168
        %410 = vst.msk [vmem:[%s306] sm:$0xff] %vm409, %v400
        %411 = vst [vmem:[%s288] sm:$0xff] %v407
        %412 = vst [vmem:[%s295] sm:$0xff] %v401
        %413 = vst [vmem:[%s302] sm:$0xff] %v408
        %p414 = scmp.lt.s32.totalorder %s28, 3
        %s415 = scalar_select %p414, %s28, 3
        %s416 = smul.addr %s415, 8
        %s417 = scalar_lea.vmem %s3, %s416
        %s418 = sand.u32 %s130, 1
        %s419 = scalar_lea.sflag [#allocation4], %s418
        %s420 = sand.u32 %s130, 1
        %s421 = smul.addr %s420, 8
        %s422 = scalar_lea.vmem [#allocation7], %s421
        %s423 = sand.u32 %s28, 1
        %s424 = scalar_lea.sflag [#allocation9], %s423
        %s425 = sand.u32 %s156, 1
        %s426 = smul.addr %s425, 8
        %s427 = scalar_lea.vmem [#allocation8], %s426
        %s428 = sand.u32 %s28, 1
        %s429 = scalar_lea.sflag [#allocation9], %s428
        %s430 = sand.u32 %s182, 1
        %s431 = smul.addr %s430, 8
        %s432 = scalar_lea.vmem [#allocation10], %s431
        // Predicated region
        $region48: #{tpu_custom_call.1} parent=31 // pred_check
          %p433 = pneg %p114
        $region49: #{tpu_custom_call.1} parent=31 // pred_check_branch
          %435 = sbr.rel (%p433) target = $region51
        $region50: #{tpu_custom_call.1} parent=31 // pred_region
          _
        $region51: #{tpu_custom_call.1} parent=31 // pred_fallthru
          _
        // Predicated region
        $region52: #{tpu_custom_call.1} parent=31 // pred_check
          %p436 = pneg %p140
        $region53: #{tpu_custom_call.1} parent=31 // pred_check_branch
          %438 = sbr.rel (%p436) target = $region55
        $region54: #{tpu_custom_call.1} parent=31 // pred_region
          %s440 = ssub.s32 128, 128
          %441 = vsyncadd %s419, %s440
          %s442 = smul.addr %s28, 128
          %s443 = scalar_lea.hbm %s4, %s442
          %s445 = sshll.u32 %s422, 4
          %s446 = int_to_ptr.vmem [resolvable:$true] %s445
          %448 = dma.vmem_to_hbm [thread:$0]  %s446, 128, %s443, %s419
        $region55: #{tpu_custom_call.1} parent=31 // pred_fallthru
          _
        // Predicated region
        $region56: #{tpu_custom_call.1} parent=31 // pred_check
          %p449 = pneg %p166
        $region57: #{tpu_custom_call.1} parent=31 // pred_check_branch
          %451 = sbr.rel (%p449) target = $region59
        $region58: #{tpu_custom_call.1} parent=31 // pred_region
          %s453 = ssub.s32 128, 128
          %454 = vsyncadd %s424, %s453
          %s455 = smul.addr %s28, 128
          %s456 = scalar_lea.hbm %s5, %s455
          %s458 = sshll.u32 %s427, 4
          %s459 = int_to_ptr.vmem [resolvable:$true] %s458
          %461 = dma.vmem_to_hbm [thread:$0]  %s459, 128, %s456, %s424
        $region59: #{tpu_custom_call.1} parent=31 // pred_fallthru
          _
        // Predicated region
        $region60: #{tpu_custom_call.1} parent=31 // pred_check
          %p462 = pneg %p192
        $region61: #{tpu_custom_call.1} parent=31 // pred_check_branch
          %464 = sbr.rel (%p462) target = $region63
        $region62: #{tpu_custom_call.1} parent=31 // pred_region
          %s466 = ssub.s32 128, 128
          %467 = vsyncadd %s429, %s466
          %s468 = smul.addr %s28, 128
          %s469 = scalar_lea.hbm %s6, %s468
          %s471 = sshll.u32 %s432, 4
          %s472 = int_to_ptr.vmem [resolvable:$true] %s471
          %474 = dma.vmem_to_hbm [thread:$0]  %s472, 128, %s469, %s429
        $region63: #{tpu_custom_call.1} parent=31 // pred_fallthru
          _
      $region32: #{tpu_custom_call.1} parent=5 // pred_fallthru
        _
      %p475 = scmp.le.s32.totalorder 2, %s23
      // Predicated region
      $region64: #{tpu_custom_call.1} parent=5 // pred_check
        %p476 = pneg %p475
      $region65: #{tpu_custom_call.1} parent=5 // pred_check_branch
        %478 = sbr.rel (%p476) target = $region67
      $region66: #{tpu_custom_call.1} parent=5 // pred_region
        %s479 = ssub.s32 %s23, 2
        // Predicated region
        $region68: #{tpu_custom_call.1} parent=66 // pred_check
          %p480 = pneg %p120
        $region69: #{tpu_custom_call.1} parent=66 // pred_check_branch
          %482 = sbr.rel (%p480) target = $region71
        $region70: #{tpu_custom_call.1} parent=66 // pred_region
          %p483 = scmp.lt.s32.totalorder %s29, 3
          %s484 = scalar_select %p483, %s29, 3
          %s485 = smul.addr %s484, 8
          %s486 = scalar_lea.vmem %s3, %s485
        $region71: #{tpu_custom_call.1} parent=66 // pred_fallthru
          _
        // Predicated region
        $region72: #{tpu_custom_call.1} parent=66 // pred_check
          %p487 = pneg %p146
        $region73: #{tpu_custom_call.1} parent=66 // pred_check_branch
          %489 = sbr.rel (%p487) target = $region75
        $region74: #{tpu_custom_call.1} parent=66 // pred_region
          %s490 = sand.u32 %s131, 1
          %s491 = scalar_lea.sflag [#allocation4], %s490
          %s492 = sand.u32 %s131, 1
          %s493 = smul.addr %s492, 8
          %s494 = scalar_lea.vmem [#allocation7], %s493
          %495 = dma.done %s491, 128
        $region75: #{tpu_custom_call.1} parent=66 // pred_fallthru
          _
        // Predicated region
        $region76: #{tpu_custom_call.1} parent=66 // pred_check
          %p496 = pneg %p172
        $region77: #{tpu_custom_call.1} parent=66 // pred_check_branch
          %498 = sbr.rel (%p496) target = $region79
        $region78: #{tpu_custom_call.1} parent=66 // pred_region
          %s499 = sand.u32 %s29, 1
          %s500 = scalar_lea.sflag [#allocation9], %s499
          %s501 = sand.u32 %s157, 1
          %s502 = smul.addr %s501, 8
          %s503 = scalar_lea.vmem [#allocation8], %s502
          %504 = dma.done %s500, 128
        $region79: #{tpu_custom_call.1} parent=66 // pred_fallthru
          _
        // Predicated region
        $region80: #{tpu_custom_call.1} parent=66 // pred_check
          %p505 = pneg %p198
        $region81: #{tpu_custom_call.1} parent=66 // pred_check_branch
          %507 = sbr.rel (%p505) target = $region83
        $region82: #{tpu_custom_call.1} parent=66 // pred_region
          %s508 = sand.u32 %s29, 1
          %s509 = scalar_lea.sflag [#allocation9], %s508
          %s510 = sand.u32 %s183, 1
          %s511 = smul.addr %s510, 8
          %s512 = scalar_lea.vmem [#allocation10], %s511
          %513 = dma.done %s509, 128
        $region83: #{tpu_custom_call.1} parent=66 // pred_fallthru
          _
      $region67: #{tpu_custom_call.1} parent=5 // pred_fallthru
        _
    $region6: #{tpu_custom_call.1} parent=1 // loop_footer
      %s27 = sadd.s32 1, %s23
    $region7: #{tpu_custom_call.1} parent=1 // loop_footer_branch
      %22 = sbr.rel target = $region3
    $region8: #{tpu_custom_call.1} parent=1 // loop_exit
      _
    %514 = vsyncpa [#allocation3], 1
    %s515 = scalar_lea.sflag [#allocation3], 1
    %516 = vsyncpa %s515, 1
    %517 = vsyncpa [#allocation4], 1
    %s518 = scalar_lea.sflag [#allocation4], 1
    %519 = vsyncpa %s518, 1
    %520 = vsyncpa [#allocation9], 1
    %s521 = scalar_lea.sflag [#allocation9], 1
    %522 = vsyncpa %s521, 1
    %523 = vsyncpa [#allocation5], 1
    %s524 = scalar_lea.sflag [#allocation5], 1
    %525 = vsyncpa %s524, 1

</llo_original>
